<compile_context>
chip_gen: v5e
topology: v5e:2x2
jax: 0.10.0
libtpu: 0.0.40
codegen_flags: <defaults>
</compile_context>

<pallas_src>
import functools
import math

import jax
import jax.numpy as jnp
from jax.experimental import pallas as pl
from jax.experimental.pallas import tpu as pltpu

IGNORE_INDEX = 255
THRESH = 0.7
MIN_KEPT = 256
# Note: default module flags are use_weight=False, reduce=False, so the 19-class
# weight vector branch is never instantiated / used.

_LANE_W = 1024          # lane width of the per-pixel CE intermediate (pass 2)
_CE_SENTINEL = -1.0     # CE value written for ignored / padded pixels


def _round_up(x, m):
    return ((x + m - 1) // m) * m


# --------------------------- kernel A: per-pixel CE ---------------------------
def _ce_kernel(pred_ref, tgt_ref, ce_ref, *, ignore_index):
    """Per-pixel cross entropy at the target class.

    pred_ref: (C, TN) logits — classes on sublanes, pixels on lanes.
    tgt_ref:  (1, TN) int32 labels (padded tail is ignore_index).
    ce_ref:   (1, TN) f32 output; ignored pixels get _CE_SENTINEL.
    """
    logits = pred_ref[...].astype(jnp.float32)                       # (C, TN)
    tgt = tgt_ref[...]                                               # (1, TN)
    valid = tgt != ignore_index
    t = jnp.where(valid, tgt, 0)

    m = jnp.max(logits, axis=0, keepdims=True)                       # (1, TN)
    lse = jnp.log(jnp.sum(jnp.exp(logits - m), axis=0, keepdims=True))
    cls = jax.lax.broadcasted_iota(jnp.int32, logits.shape, 0)       # (C, TN)
    logit_t = jnp.sum(jnp.where(cls == t, logits, 0.0), axis=0, keepdims=True)

    ce = (m + lse) - logit_t                                         # -log_softmax[t]
    ce_ref[...] = jnp.where(valid, ce, _CE_SENTINEL)


# ----------------- kernel B: OHEM mask + masked mean (fused) ------------------
def _masked_mean_kernel(thr_ref, ce_ref, out_ref, sum_ref, cnt_ref, *,
                        num_rows, rows_blk):
    """kept = ce >= threshold_ce (sentinel -1 auto-excludes ignored pixels).

    Accumulates wide (rows_blk, LANE) vector sums (plain VALU adds that co-issue
    with the loads); the single cross-lane/sublane reduce happens only at the end.
    """
    i = pl.program_id(0)

    @pl.when(i == 0)
    def _():
        sum_ref[...] = jnp.zeros_like(sum_ref)
        cnt_ref[...] = jnp.zeros_like(cnt_ref)

    ce = ce_ref[...]                                                 # (rows_blk, LANE)
    kept = ce >= thr_ref[0, 0]
    if num_rows % rows_blk != 0:                                     # ragged tail rows
        rows = jax.lax.broadcasted_iota(jnp.int32, ce.shape, 0) + i * rows_blk
        kept = jnp.logical_and(kept, rows < num_rows)
    sum_ref[...] += jnp.where(kept, ce, 0.0)
    cnt_ref[...] += kept.astype(jnp.float32)

    @pl.when(i == pl.num_programs(0) - 1)
    def _():
        # Matches PyTorch CrossEntropyLoss(reduction='mean'): NaN if nothing kept.
        out_ref[...] = (jnp.sum(sum_ref[...], keepdims=True) /
                        jnp.sum(cnt_ref[...], keepdims=True))


def ohem_cross_entropy_2d(pred, target, *, ignore_index=IGNORE_INDEX,
                          thresh=THRESH, min_kept=MIN_KEPT, block_n=32768):
    """Equivalent of OhemCrossEntropy2dTensor(...).forward(pred, target).

    pred:   (B, C, H, W) float logits (NCHW, as in PyTorch); any float dtype.
    target: (B, H, W) int labels, `ignore_index` marks ignored pixels.
    """
    b, c, h, w = pred.shape
    hw = h * w
    n = b * hw

    # ---- kernel A tiling: classes on sublanes, pixels on lanes ----
    block_n = max(_LANE_W, (int(block_n) // _LANE_W) * _LANE_W)
    block_n = min(block_n, _round_up(hw, _LANE_W))
    # Keep a double-buffered (c, block_n) f32 tile under ~8 MiB: fits the 16 MiB
    # default scoped VMEM on v5e, well inside v6e/v7x's 32 MiB.
    vmem_cap = max(_LANE_W, ((4 * 1024 * 1024) // (4 * c)) // _LANE_W * _LANE_W)
    block_n = min(block_n, vmem_cap)

    hw_pad = _round_up(hw, block_n)
    n_tiles = hw_pad // block_n

    logits = pred.reshape(b, c, hw)                  # no transpose, native dtype
    tgt = target.reshape(b, hw).astype(jnp.int32)
    if hw_pad != hw:
        # Padding tgt is cheap (N*4 bytes) and marks the ragged logits tail ignored.
        tgt = jnp.pad(tgt, ((0, 0), (0, hw_pad - hw)), constant_values=ignore_index)
        if hw < block_n:
            # Tiny single-tile input: padding logits costs < one tile; for
            # hw >= block_n the ragged last block is handled by the grid + mask.
            logits = jnp.pad(logits, ((0, 0), (0, 0), (0, hw_pad - hw)))
    tgt3 = tgt.reshape(b, 1, hw_pad)

    kernel_a = functools.partial(_ce_kernel, ignore_index=ignore_index)
    ce = pl.pallas_call(
        kernel_a,
        out_shape=jax.ShapeDtypeStruct((b, 1, hw_pad), jnp.float32),
        grid_spec=pltpu.PrefetchScalarGridSpec(
            num_scalar_prefetch=0,
            grid=(b, n_tiles),
            in_specs=[
                pl.BlockSpec((None, c, block_n), lambda bi, ti: (bi, 0, ti)),
                pl.BlockSpec((None, 1, block_n), lambda bi, ti: (bi, 0, ti)),
            ],
            out_specs=pl.BlockSpec((None, 1, block_n), lambda bi, ti: (bi, 0, ti)),
        ),
        compiler_params=pltpu.CompilerParams(
            dimension_semantics=("parallel", "parallel")),
    )(logits, tgt3)

    # ---- OHEM threshold selection in CE space (glue) ----
    # prob <= thr  <=>  ce >= -log(thr);  kth-smallest prob  <=>  kth-largest ce.
    neg_log_thresh = jnp.float32(-math.log(thresh))
    ce_flat = ce.reshape(-1)
    num_valid = jnp.sum((ce_flat >= 0.0).astype(jnp.int32))   # sentinel (-1) excluded
    do_ohem = jnp.logical_and(num_valid >= min_kept, num_valid > 0)
    if min_kept > 0:
        k = min(n, min_kept)
        num_hard = jnp.sum((ce_flat >= neg_log_thresh).astype(jnp.int32))

        # TODO(synk): kth-largest selection has no clean Pallas primitive; use
        # jax.lax.top_k, but only when fewer than min_kept pixels clear `thresh`.
        def _from_topk(_):
            kth_ce = jax.lax.top_k(ce_flat, k)[0][k - 1]
            return jnp.minimum(kth_ce, neg_log_thresh)

        skip_topk = jnp.logical_or(num_hard >= k, jnp.logical_not(do_ohem))
        thr_ce = jax.lax.cond(skip_topk, lambda _: neg_log_thresh, _from_topk, None)
    else:
        # PyTorch applies the kept-mask only when min_kept > 0 -> plain masked mean.
        do_ohem = jnp.bool_(False)
        thr_ce = neg_log_thresh
    # -0.5 keeps every valid pixel (ce >= 0) and still excludes the -1 sentinel.
    thr_eff = jnp.where(do_ohem, thr_ce, jnp.float32(-0.5))
    thr_eff = thr_eff.astype(jnp.float32).reshape(1, 1)

    # ---- kernel B: fused OHEM mask + masked mean over sublane-dense blocks ----
    rows_total = (b * hw_pad) // _LANE_W
    rows_blk = rows_total if rows_total <= 512 else 512
    grid_b = pl.cdiv(rows_total, rows_blk)
    ce2 = ce.reshape(rows_total, _LANE_W)        # contiguous -> free XLA reshape

    kernel_b = functools.partial(_masked_mean_kernel,
                                 num_rows=rows_total, rows_blk=rows_blk)
    loss = pl.pallas_call(
        kernel_b,
        out_shape=jax.ShapeDtypeStruct((1, 1), jnp.float32),
        grid_spec=pltpu.PrefetchScalarGridSpec(
            num_scalar_prefetch=0,
            grid=(grid_b,),
            in_specs=[
                pl.BlockSpec(memory_space=pltpu.MemorySpace.SMEM),
                pl.BlockSpec((rows_blk, _LANE_W), lambda i: (i, 0)),
            ],
            out_specs=pl.BlockSpec((1, 1), lambda i: (0, 0)),
            scratch_shapes=[pltpu.VMEM((rows_blk, _LANE_W), jnp.float32),
                            pltpu.VMEM((rows_blk, _LANE_W), jnp.float32)]),
        compiler_params=pltpu.CompilerParams(
            dimension_semantics=("arbitrary",)),
        # TODO(synk): on v7x a per-batch 'parallel' partial-sum variant would use
        # both TensorCores; this pass is tiny (one N*4-byte stream) so we keep it
        # single-core for simplicity.
    )(thr_eff, ce2)

    return loss[0, 0]


def _reference_loss(pred, target, ignore_index=IGNORE_INDEX,
                    thresh=THRESH, min_kept=MIN_KEPT):
    """Pure-JAX reference mirroring the PyTorch forward (prob-space OHEM)."""
    b, c, h, w = pred.shape
    n = b * h * w
    tgt = target.reshape(n)
    valid = tgt != ignore_index
    tgt_c = jnp.where(valid, tgt, 0)
    num_valid = jnp.sum(valid)
    logits = jnp.transpose(pred, (0, 2, 3, 1)).reshape(n, c).astype(jnp.float32)
    prob = jax.nn.softmax(logits, axis=-1)
    prob_t = prob[jnp.arange(n), tgt_c]
    mask_prob = jnp.where(valid, prob_t, 1.0)
    sorted_p = jnp.sort(mask_prob)
    kth = sorted_p[min(n, min_kept) - 1]
    threshold = jnp.where(kth > thresh, kth, jnp.float32(thresh))
    kept = mask_prob <= threshold
    do_ohem = jnp.logical_and(num_valid >= min_kept, num_valid > 0)
    final_valid = jnp.where(do_ohem, valid & kept, valid).astype(jnp.float32)
    logp = jax.nn.log_softmax(logits, axis=-1)
    ce = -logp[jnp.arange(n), tgt_c]
    return jnp.sum(ce * final_valid) / jnp.sum(final_valid)


if __name__ == "__main__":
    key = jax.random.PRNGKey(0)
    kp, kt, km = jax.random.split(key, 3)

    B, C, H, W = 2, 4, 16, 16
    pred = jax.random.normal(kp, (B, C, H, W), dtype=jnp.float32) * 2.0
    target = jax.random.randint(kt, (B, H, W), 0, C, dtype=jnp.int32)
    # mark ~10% of pixels as ignored
    ignored = jax.random.uniform(km, (B, H, W)) < 0.1
    target = jnp.where(ignored, IGNORE_INDEX, target)

    loss = jax.block_until_ready(ohem_cross_entropy_2d(pred, target))

    ref = _reference_loss(pred, target)
    assert jnp.isfinite(loss), f"loss not finite: {loss}"
    assert jnp.allclose(loss, ref, rtol=1e-4, atol=1e-4), (loss, ref)
    print("KERNEL_OK")
</pallas_src>

<mosaic_0001>
module attributes {stable_mosaic.version = 11 : i64} {
  func.func @_ce_kernel(%arg0: i32, %arg1: i32, %arg2: memref<1x4x1024xf32, #tpu.memory_space<vmem>>, %arg3: memref<1x1x1024xi32, #tpu.memory_space<vmem>>, %arg4: memref<1x1x1024xf32, #tpu.memory_space<vmem>>) attributes {dimension_semantics = [#tpu.dimension_semantics<parallel>, #tpu.dimension_semantics<parallel>], iteration_bounds = array<i64: 2, 1>, scalar_prefetch = 0 : i64, scratch_operands = 0 : i64, tpu.core_type = #tpu.core_type<tc>, window_params = [{transform_indices = @transform_0, window_bounds = array<i64: 1, 4, 1024>}, {transform_indices = @transform_1, window_bounds = array<i64: 1, 1, 1024>}, {transform_indices = @transform_2, window_bounds = array<i64: 1, 1, 1024>}]} {
    %c0 = arith.constant 0 : index
    %c0_0 = arith.constant 0 : index
    %c0_1 = arith.constant 0 : index
    %0 = vector.load %arg2[%c0, %c0_0, %c0_1] : memref<1x4x1024xf32, #tpu.memory_space<vmem>>, vector<1x4x1024xf32>
    %1 = vector.shape_cast %0 : vector<1x4x1024xf32> to vector<4x1024xf32>
    %c0_2 = arith.constant 0 : index
    %c0_3 = arith.constant 0 : index
    %c0_4 = arith.constant 0 : index
    %2 = vector.load %arg3[%c0_2, %c0_3, %c0_4] : memref<1x1x1024xi32, #tpu.memory_space<vmem>>, vector<1x1x1024xi32>
    %3 = vector.shape_cast %2 : vector<1x1x1024xi32> to vector<1x1024xi32>
    %c255_i32 = arith.constant 255 : i32
    %4 = vector.broadcast %c255_i32 : i32 to vector<1x1024xi32>
    %5 = arith.cmpi ne, %3, %4 : vector<1x1024xi32>
    %c0_i32 = arith.constant 0 : i32
    %6 = vector.broadcast %c0_i32 : i32 to vector<1x1024xi32>
    %7 = arith.select %5, %3, %6 : vector<1x1024xi1>, vector<1x1024xi32>
    %cst = arith.constant dense<0xFF800000> : vector<1024xf32>
    %8 = vector.multi_reduction <maximumf>, %1, %cst [0] : vector<4x1024xf32> to vector<1024xf32>
    %9 = vector.shape_cast %8 : vector<1024xf32> to vector<1x1024xf32>
    %10 = vector.broadcast %9 : vector<1x1024xf32> to vector<4x1024xf32>
    %11 = arith.subf %1, %10 : vector<4x1024xf32>
    %12 = math.exp %11 : vector<4x1024xf32>
    %cst_5 = arith.constant dense<0.000000e+00> : vector<1024xf32>
    %13 = vector.multi_reduction <add>, %12, %cst_5 [0] : vector<4x1024xf32> to vector<1024xf32>
    %14 = vector.shape_cast %13 : vector<1024xf32> to vector<1x1024xf32>
    %15 = math.log %14 : vector<1x1024xf32>
    %16 = tpu.iota {dimensions = array<i32: 0>} : vector<4x1024xi32>
    %17 = vector.broadcast %7 : vector<1x1024xi32> to vector<4x1024xi32>
    %18 = arith.cmpi eq, %16, %17 : vector<4x1024xi32>
    %cst_6 = arith.constant 0.000000e+00 : f32
    %19 = vector.broadcast %cst_6 : f32 to vector<4x1024xf32>
    %20 = arith.select %18, %1, %19 : vector<4x1024xi1>, vector<4x1024xf32>
    %cst_7 = arith.constant dense<0.000000e+00> : vector<1024xf32>
    %21 = vector.multi_reduction <add>, %20, %cst_7 [0] : vector<4x1024xf32> to vector<1024xf32>
    %22 = vector.shape_cast %21 : vector<1024xf32> to vector<1x1024xf32>
    %23 = arith.addf %9, %15 : vector<1x1024xf32>
    %24 = arith.subf %23, %22 : vector<1x1024xf32>
    %cst_8 = arith.constant -1.000000e+00 : f32
    %25 = vector.broadcast %cst_8 : f32 to vector<1x1024xf32>
    %26 = arith.select %5, %24, %25 : vector<1x1024xi1>, vector<1x1024xf32>
    %c0_9 = arith.constant 0 : index
    %c0_10 = arith.constant 0 : index
    %c0_11 = arith.constant 0 : index
    %27 = vector.load %arg4[%c0_9, %c0_10, %c0_11] : memref<1x1x1024xf32, #tpu.memory_space<vmem>>, vector<1x1x1024xf32>
    %28 = vector.shape_cast %27 : vector<1x1x1024xf32> to vector<1x1024xf32>
    %29 = vector.shape_cast %26 : vector<1x1024xf32> to vector<1x1x1024xf32>
    tpu.vector_store %arg4[%c0_9, %c0_10, %c0_11], %29 {strides = array<i32>} : memref<1x1x1024xf32, #tpu.memory_space<vmem>>, vector<1x1x1024xf32>,
    return
  }
  func.func @transform_0(%arg0: i32, %arg1: i32) -> (i32, i32, i32) {
    %c0_i32 = arith.constant 0 : i32
    %c0_i32_0 = arith.constant 0 : i32
    return %arg0, %c0_i32, %arg1 : i32, i32, i32
  }
  func.func @transform_1(%arg0: i32, %arg1: i32) -> (i32, i32, i32) {
    %c0_i32 = arith.constant 0 : i32
    %c0_i32_0 = arith.constant 0 : i32
    return %arg0, %c0_i32, %arg1 : i32, i32, i32
  }
  func.func @transform_2(%arg0: i32, %arg1: i32) -> (i32, i32, i32) {
    %c0_i32 = arith.constant 0 : i32
    %c0_i32_0 = arith.constant 0 : i32
    return %arg0, %c0_i32, %arg1 : i32, i32, i32
  }
}

</mosaic_0001>

<llo_original>
// kernel: tpu_custom_call.1
$region0: #{tpu_custom_call.1}
  #allocation0 [shape = 'u32[]', space=smem, size = 0x4, offset = 0x4, fixed_abs, tag = 'smem constant byte address 0x4 - core index']
  #allocation1 [shape = 'u32[72,128]{1,0:T(1,128)}', space=vmem, size = 0x9000, scoped, tag = 'internal scratch']
  %s0 = inlined_call_operand.hbm [shape: f32[2,4,1024], index: 0, kind: input, shape index: {}]
  %s1 = inlined_call_operand.hbm [shape: s32[2,1,1024], index: 1, kind: input, shape index: {}]
  %s2 = inlined_call_operand.hbm [shape: f32[2,1,1024], index: 2, kind: output, shape index: {}]
  %s3 = sld [smem:[#allocation0]]
  $region49: #{tpu_custom_call.1} parent=0
    _
  %s5 = ssub.s32 1, %s3
  %s6 = scalar_select 0, %s5, %s3
  $region1: #{tpu_custom_call.1} parent=0
    #allocation2 [shape = 'u8[32768]{0}', space=vmem, size = 0x8000, scoped, tag = 'input window, operand 0']
    #allocation3 [shape = 's32[2]{0}', space=sflag, size = 0x8, scoped, tag = 'scoped memory for tpu_custom_call.1']
    #allocation4 [shape = 's32[2]{0}', space=sflag, size = 0x8, scoped, tag = 'scoped memory for tpu_custom_call.1']
    #allocation5 [shape = 'u8[8192]{0}', space=vmem, size = 0x2000, scoped, tag = 'input window, operand 1']
    #allocation6 [shape = 's32[2]{0}', space=sflag, size = 0x8, scoped, tag = 'scoped memory for tpu_custom_call.1']
    #allocation7 [shape = 'u8[8192]{0}', space=vmem, size = 0x2000, scoped, tag = 'output window, operand 0']
    %7 = vsyncpa [#allocation3], 0
    %s8 = scalar_lea.sflag [#allocation3], 1
    %9 = vsyncpa %s8, 0
    %10 = vsyncpa [#allocation6], 0
    %s11 = scalar_lea.sflag [#allocation6], 1
    %12 = vsyncpa %s11, 0
    %13 = vsyncpa [#allocation4], 0
    %s14 = scalar_lea.sflag [#allocation4], 1
    %15 = vsyncpa %s14, 0
    loop: start=0, step=1, limit=4
    $region2: #{tpu_custom_call.1} parent=1 // loop_pre_header
      _
    $region3: #{tpu_custom_call.1} parent=1 // loop_header
      %s17 = sphi 0, %s21
      %p18 = scmp.ge.s32.totalorder %s17, 4
      %s24 = sphi 0, %s36
      %s25 = sphi 0, %s32
      %s26 = sphi 0, %s24
      %s27 = sphi 0, %s25
      %s28 = sphi 0, %s26
      %s29 = sphi 0, %s27
      %s41 = sphi 0, %s43
      %s44 = sphi 0, %s41
      %s45 = sphi 0, %s44
      %s61 = sphi 0, %s45
      %s69 = sphi 0, %s71
      %s72 = sphi 0, %s69
      %s73 = sphi 0, %s72
      %s89 = sphi 0, %s73
      %s97 = sphi 0, %s99
      %s100 = sphi 0, %s97
      %s101 = sphi 0, %s100
      %s117 = sphi 0, %s101
    $region4: #{tpu_custom_call.1} parent=1 // loop_header_branch
      %20 = sbr.rel (%p18) target = $region8
    $region5: #{tpu_custom_call.1} parent=1 // loop_body
      %s22 = ssub.s32 %s17, 1
      %s23 = ssub.s32 %s17, 2
      %s30 = sadd.s32 1, %s25
      %p31 = scmp.ge.s32.totalorder %s30, 1
      %s32 = scalar_select %p31, 0, %s30
      %s33 = sadd.s32 1, %s24
      %s34 = scalar_select %p31, %s33, %s24
      %p35 = scmp.ge.s32.totalorder %s34, 2
      %s36 = scalar_select %p35, 0, %s34
      %s37 = ssub.s32 %s24, %s36
      %s38 = ssub.s32 %s25, %s32
      %s39 = sor.u32 %s37, %s38
      %p40 = scmp.eq.s32.totalorder %s39, 0
      %s42 = sadd.s32 %s41, 1
      %s43 = scalar_select %p40, %s41, %s42
      %p46 = pneg %p40
      %p47 = scmp.eq.s32.totalorder %s17, 1
      %p48 = por %p46, %p47
      %p49 = scmp.ne.s32.totalorder %s41, %s44
      %p50 = scmp.eq.s32.totalorder %s17, 0
      %p51 = por %p49, %p50
      %p52 = scmp.ne.s32.totalorder %s41, %s44
      %p53 = scmp.eq.s32.totalorder %s22, 1
      %p54 = por %p52, %p53
      %p55 = scmp.ne.s32.totalorder %s44, %s45
      %p56 = scmp.eq.s32.totalorder %s22, 0
      %p57 = por %p55, %p56
      %p58 = scmp.ne.s32.totalorder %s44, %s45
      %p59 = scmp.eq.s32.totalorder %s23, 1
      %p60 = por %p58, %p59
      %p62 = scmp.ne.s32.totalorder %s45, %s61
      %p63 = scmp.eq.s32.totalorder %s23, 0
      %p64 = por %p62, %p63
      %s65 = ssub.s32 %s24, %s36
      %s66 = ssub.s32 %s25, %s32
      %s67 = sor.u32 %s65, %s66
      %p68 = scmp.eq.s32.totalorder %s67, 0
      %s70 = sadd.s32 %s69, 1
      %s71 = scalar_select %p68, %s69, %s70
      %p74 = pneg %p68
      %p75 = scmp.eq.s32.totalorder %s17, 1
      %p76 = por %p74, %p75
      %p77 = scmp.ne.s32.totalorder %s69, %s72
      %p78 = scmp.eq.s32.totalorder %s17, 0
      %p79 = por %p77, %p78
      %p80 = scmp.ne.s32.totalorder %s69, %s72
      %p81 = scmp.eq.s32.totalorder %s22, 1
      %p82 = por %p80, %p81
      %p83 = scmp.ne.s32.totalorder %s72, %s73
      %p84 = scmp.eq.s32.totalorder %s22, 0
      %p85 = por %p83, %p84
      %p86 = scmp.ne.s32.totalorder %s72, %s73
      %p87 = scmp.eq.s32.totalorder %s23, 1
      %p88 = por %p86, %p87
      %p90 = scmp.ne.s32.totalorder %s73, %s89
      %p91 = scmp.eq.s32.totalorder %s23, 0
      %p92 = por %p90, %p91
      %s93 = ssub.s32 %s24, %s36
      %s94 = ssub.s32 %s25, %s32
      %s95 = sor.u32 %s93, %s94
      %p96 = scmp.eq.s32.totalorder %s95, 0
      %s98 = sadd.s32 %s97, 1
      %s99 = scalar_select %p96, %s97, %s98
      %p102 = pneg %p96
      %p103 = scmp.eq.s32.totalorder %s17, 1
      %p104 = por %p102, %p103
      %p105 = scmp.ne.s32.totalorder %s97, %s100
      %p106 = scmp.eq.s32.totalorder %s17, 0
      %p107 = por %p105, %p106
      %p108 = scmp.ne.s32.totalorder %s97, %s100
      %p109 = scmp.eq.s32.totalorder %s22, 1
      %p110 = por %p108, %p109
      %p111 = scmp.ne.s32.totalorder %s100, %s101
      %p112 = scmp.eq.s32.totalorder %s22, 0
      %p113 = por %p111, %p112
      %p114 = scmp.ne.s32.totalorder %s100, %s101
      %p115 = scmp.eq.s32.totalorder %s23, 1
      %p116 = por %p114, %p115
      %p118 = scmp.ne.s32.totalorder %s101, %s117
      %p119 = scmp.eq.s32.totalorder %s23, 0
      %p120 = por %p118, %p119
      %p121 = scmp.le.s32.totalorder 1, %s17
      %p122 = scmp.lt.s32.totalorder %s17, 3
      %p123 = pnand %p121, %p122
      %p124 = pneg %p123
      // Predicated region
      $region9: #{tpu_custom_call.1} parent=5 // pred_check
        _
      $region10: #{tpu_custom_call.1} parent=5 // pred_check_branch
        %126 = sbr.rel (%p123) target = $region12
      $region11: #{tpu_custom_call.1} parent=5 // pred_region
        %s127 = ssub.s32 %s17, 1
      $region12: #{tpu_custom_call.1} parent=5 // pred_fallthru
        _
      %p128 = scmp.lt.s32.totalorder %s17, 2
      // Predicated region
      $region13: #{tpu_custom_call.1} parent=5 // pred_check
        %p129 = pneg %p128
      $region14: #{tpu_custom_call.1} parent=5 // pred_check_branch
        %131 = sbr.rel (%p129) target = $region16
      $region15: #{tpu_custom_call.1} parent=5 // pred_region
        // Predicated region
        $region17: #{tpu_custom_call.1} parent=15 // pred_check
          %p132 = pneg %p51
        $region18: #{tpu_custom_call.1} parent=15 // pred_check_branch
          %134 = sbr.rel (%p132) target = $region20
        $region19: #{tpu_custom_call.1} parent=15 // pred_region
          %s135 = sand.u32 %s41, 1
          %s136 = scalar_lea.sflag [#allocation3], %s135
          %s137 = sand.u32 %s41, 1
          %s138 = smul.addr %s137, 32
          %s139 = scalar_lea.vmem [#allocation2], %s138
          %s140 = smul.u32 8, %s25
          %142 = vsyncadd %s136, 0
          %s143 = smul.addr %s24, 8
          %s144 = sadd.s32 %s140, %s143
          %s145 = smul.addr %s144, 4
          %s146 = scalar_lea.hbm %s0, %s145
          %s148 = sshll.u32 %s146, 4
          %s149 = int_to_ptr.hbm [resolvable:$true] %s148
          %s150 = sshll.u32 %s139, 4
          %s151 = int_to_ptr.vmem [resolvable:$true] %s150
          %153 = dma.hbm_to_vmem [thread:$0]  %s149, 512, %s151, %s136
        $region20: #{tpu_custom_call.1} parent=15 // pred_fallthru
          _
        // Predicated region
        $region21: #{tpu_custom_call.1} parent=15 // pred_check
          %p154 = pneg %p79
        $region22: #{tpu_custom_call.1} parent=15 // pred_check_branch
          %156 = sbr.rel (%p154) target = $region24
        $region23: #{tpu_custom_call.1} parent=15 // pred_region
          %s157 = sand.u32 %s69, 1
          %s158 = scalar_lea.sflag [#allocation6], %s157
          %s159 = sand.u32 %s69, 1
          %s160 = smul.addr %s159, 8
          %s161 = scalar_lea.vmem [#allocation5], %s160
          %s162 = smul.u32 8, %s25
          %164 = vsyncadd %s158, 0
          %s165 = smul.addr %s24, 8
          %s166 = sadd.s32 %s162, %s165
          %s167 = scalar_lea.hbm %s1, %s166
          %s169 = sshll.u32 %s167, 4
          %s170 = int_to_ptr.hbm [resolvable:$true] %s169
          %s171 = sshll.u32 %s161, 4
          %s172 = int_to_ptr.vmem [resolvable:$true] %s171
          %174 = dma.hbm_to_vmem [thread:$0]  %s170, 128, %s172, %s158
        $region24: #{tpu_custom_call.1} parent=15 // pred_fallthru
          _
      $region16: #{tpu_custom_call.1} parent=5 // pred_fallthru
        _
      %p175 = scmp.le.s32.totalorder 1, %s17
      %p176 = scmp.lt.s32.totalorder %s17, 3
      %p177 = pnand %p175, %p176
      %p178 = pneg %p177
      // Predicated region
      $region25: #{tpu_custom_call.1} parent=5 // pred_check
        _
      $region26: #{tpu_custom_call.1} parent=5 // pred_check_branch
        %180 = sbr.rel (%p177) target = $region28
      $region27: #{tpu_custom_call.1} parent=5 // pred_region
        %s181 = ssub.s32 %s17, 1
        %s182 = sand.u32 %s44, 1
        %s183 = scalar_lea.sflag [#allocation3], %s182
        %s184 = sand.u32 %s44, 1
        %s185 = smul.addr %s184, 32
        %s186 = scalar_lea.vmem [#allocation2], %s185
        // Predicated region
        $region29: #{tpu_custom_call.1} parent=27 // pred_check
          %p187 = pneg %p57
        $region30: #{tpu_custom_call.1} parent=27 // pred_check_branch
          %189 = sbr.rel (%p187) target = $region32
        $region31: #{tpu_custom_call.1} parent=27 // pred_region
          %191 = dma.done %s183, 512
        $region32: #{tpu_custom_call.1} parent=27 // pred_fallthru
          _
        %s192 = sand.u32 %s72, 1
        %s193 = scalar_lea.sflag [#allocation6], %s192
        %s194 = sand.u32 %s72, 1
        %s195 = smul.addr %s194, 8
        %s196 = scalar_lea.vmem [#allocation5], %s195
        // Predicated region
        $region33: #{tpu_custom_call.1} parent=27 // pred_check
          %p197 = pneg %p85
        $region34: #{tpu_custom_call.1} parent=27 // pred_check_branch
          %199 = sbr.rel (%p197) target = $region36
        $region35: #{tpu_custom_call.1} parent=27 // pred_region
          %201 = dma.done %s193, 128
        $region36: #{tpu_custom_call.1} parent=27 // pred_fallthru
          _
        %s202 = sand.u32 %s44, 1
        %s203 = scalar_lea.sflag [#allocation3], %s202
        %s204 = sand.u32 %s44, 1
        %s205 = smul.addr %s204, 32
        %s206 = scalar_lea.vmem [#allocation2], %s205
        %p207 = pneg %p57
        %p208 = pneg %p54
        %s209 = sand.u32 %s72, 1
        %s210 = scalar_lea.sflag [#allocation6], %s209
        %s211 = sand.u32 %s72, 1
        %s212 = smul.addr %s211, 8
        %s213 = scalar_lea.vmem [#allocation5], %s212
        %p214 = pneg %p85
        %p215 = pneg %p82
        %p216 = pneg %p113
        %p217 = pneg %p110
        %s218 = sand.u32 %s100, 1
        %s219 = scalar_lea.sflag [#allocation4], %s218
        %s220 = sand.u32 %s100, 1
        %s221 = smul.addr %s220, 8
        %s222 = scalar_lea.vmem [#allocation7], %s221
        %s223 = smul.u32 8, %s27
        %s224 = smul.u32 8, %s27
        %s225 = smul.u32 8, %s27
        %v226 = vld [vmem:[%s186] sm:$0xff]
        %v227 = vld [vmem:[%s186 + $0x8] sm:$0xff]
        %v228 = vld [vmem:[%s186 + $0x10] sm:$0xff]
        %v229 = vld [vmem:[%s186 + $0x18] sm:$0xff]
        %v230 = vld [vmem:[%s196] sm:$0xff]
        %vm231 = vcmp.ne.s32.totalorder %v230, 255
        %v232 = vsel %vm231, %v230, 0
        %237 = vst [vmem:[#allocation1] ss:$2 sm:$0xff] %v226
        %s238 = scalar_lea.vmem [#allocation1], 16
        %239 = vst [vmem:[%s238] ss:$2 sm:$0xff] %v227
        %s240 = scalar_lea.vmem [#allocation1], 32
        %241 = vst [vmem:[%s240] ss:$2 sm:$0xff] %v228
        %s242 = scalar_lea.vmem [#allocation1], 48
        %243 = vst [vmem:[%s242] ss:$2 sm:$0xff] %v229
        %v244 = vld.sshfl [vmem:[#allocation1] sm:$0xff pattern:$0x75316420]
        %v245 = vld.sshfl [vmem:[#allocation1 + $0x8] sm:$0xff pattern:$0x75316420]
        %v246 = vld.sshfl [vmem:[#allocation1 + $0x10] sm:$0xff pattern:$0x75316420]
        %v247 = vld.sshfl [vmem:[#allocation1 + $0x18] sm:$0xff pattern:$0x75316420]
        %v248 = vld.sshfl [vmem:[#allocation1 + $0x20] sm:$0xff pattern:$0x75316420]
        %v249 = vld.sshfl [vmem:[#allocation1 + $0x28] sm:$0xff pattern:$0x75316420]
        %v250 = vld.sshfl [vmem:[#allocation1 + $0x30] sm:$0xff pattern:$0x75316420]
        %v251 = vld.sshfl [vmem:[#allocation1 + $0x38] sm:$0xff pattern:$0x75316420]
        %vm260 = vcmask 1043456
        %v261 = vsel %vm260, %v244, -inf
        %v262 = vrot.slane %v261, 4
        %v263 = vmax.f32 %v261, %v262
        %v264 = vrot.slane %v263, 2
        %v265 = vmax.f32 %v263, %v264
        %v266 = vrot.slane %v265, 1
        %v267 = vmax.f32 %v265, %v266
        %v268 = vsel %vm260, %v245, -inf
        %v269 = vrot.slane %v268, 4
        %v270 = vmax.f32 %v268, %v269
        %v271 = vrot.slane %v270, 2
        %v272 = vmax.f32 %v270, %v271
        %v273 = vrot.slane %v272, 1
        %v274 = vmax.f32 %v272, %v273
        %v275 = vsel %vm260, %v246, -inf
        %v276 = vrot.slane %v275, 4
        %v277 = vmax.f32 %v275, %v276
        %v278 = vrot.slane %v277, 2
        %v279 = vmax.f32 %v277, %v278
        %v280 = vrot.slane %v279, 1
        %v281 = vmax.f32 %v279, %v280
        %v282 = vsel %vm260, %v247, -inf
        %v283 = vrot.slane %v282, 4
        %v284 = vmax.f32 %v282, %v283
        %v285 = vrot.slane %v284, 2
        %v286 = vmax.f32 %v284, %v285
        %v287 = vrot.slane %v286, 1
        %v288 = vmax.f32 %v286, %v287
        %v289 = vsel %vm260, %v248, -inf
        %v290 = vrot.slane %v289, 4
        %v291 = vmax.f32 %v289, %v290
        %v292 = vrot.slane %v291, 2
        %v293 = vmax.f32 %v291, %v292
        %v294 = vrot.slane %v293, 1
        %v295 = vmax.f32 %v293, %v294
        %v296 = vsel %vm260, %v249, -inf
        %v297 = vrot.slane %v296, 4
        %v298 = vmax.f32 %v296, %v297
        %v299 = vrot.slane %v298, 2
        %v300 = vmax.f32 %v298, %v299
        %v301 = vrot.slane %v300, 1
        %v302 = vmax.f32 %v300, %v301
        %v303 = vsel %vm260, %v250, -inf
        %v304 = vrot.slane %v303, 4
        %v305 = vmax.f32 %v303, %v304
        %v306 = vrot.slane %v305, 2
        %v307 = vmax.f32 %v305, %v306
        %v308 = vrot.slane %v307, 1
        %v309 = vmax.f32 %v307, %v308
        %v310 = vsel %vm260, %v251, -inf
        %v311 = vrot.slane %v310, 4
        %v312 = vmax.f32 %v310, %v311
        %v313 = vrot.slane %v312, 2
        %v314 = vmax.f32 %v312, %v313
        %v315 = vrot.slane %v314, 1
        %v316 = vmax.f32 %v314, %v315
        %v325 = vrot.slane %v274, 4
        %v326 = vrot.slane %v288, 4
        %v327 = vrot.slane %v302, 4
        %v328 = vrot.slane %v316, 4
        %v329 = vsel %vm260, %v267, %v325
        %v330 = vsel %vm260, %v281, %v326
        %v331 = vsel %vm260, %v295, %v327
        %v332 = vsel %vm260, %v309, %v328
        %v337 = vsub.f32 %v226, %v329
        %v338 = vsub.f32 %v227, %v330
        %v339 = vsub.f32 %v228, %v331
        %v340 = vsub.f32 %v229, %v332
        %v341 = vmul.f32 %v337, 1.442695
        %v342 = vpow.pop %v341
        %v343 = vmul.f32 %v338, 1.442695
        %v344 = vpow.pop %v343
        %v345 = vmul.f32 %v339, 1.442695
        %v346 = vpow.pop %v345
        %v347 = vmul.f32 %v340, 1.442695
        %v348 = vpow.pop %v347
        %353 = vst [vmem:[#allocation1] ss:$2 sm:$0xff] %v342
        %s354 = scalar_lea.vmem [#allocation1], 16
        %355 = vst [vmem:[%s354] ss:$2 sm:$0xff] %v344
        %s356 = scalar_lea.vmem [#allocation1], 32
        %357 = vst [vmem:[%s356] ss:$2 sm:$0xff] %v346
        %s358 = scalar_lea.vmem [#allocation1], 48
        %359 = vst [vmem:[%s358] ss:$2 sm:$0xff] %v348
        %v360 = vld.sshfl [vmem:[#allocation1] sm:$0xff pattern:$0x75316420]
        %v361 = vld.sshfl [vmem:[#allocation1 + $0x8] sm:$0xff pattern:$0x75316420]
        %v362 = vld.sshfl [vmem:[#allocation1 + $0x10] sm:$0xff pattern:$0x75316420]
        %v363 = vld.sshfl [vmem:[#allocation1 + $0x18] sm:$0xff pattern:$0x75316420]
        %v364 = vld.sshfl [vmem:[#allocation1 + $0x20] sm:$0xff pattern:$0x75316420]
        %v365 = vld.sshfl [vmem:[#allocation1 + $0x28] sm:$0xff pattern:$0x75316420]
        %v366 = vld.sshfl [vmem:[#allocation1 + $0x30] sm:$0xff pattern:$0x75316420]
        %v367 = vld.sshfl [vmem:[#allocation1 + $0x38] sm:$0xff pattern:$0x75316420]
        %v376 = vsel %vm260, %v360, 0.0
        %v377 = vrot.slane %v376, 4
        %v378 = vadd.f32 %v376, %v377
        %v379 = vrot.slane %v378, 2
        %v380 = vadd.f32 %v378, %v379
        %v381 = vrot.slane %v380, 1
        %v382 = vadd.f32 %v380, %v381
        %v383 = vsel %vm260, %v361, 0.0
        %v384 = vrot.slane %v383, 4
        %v385 = vadd.f32 %v383, %v384
        %v386 = vrot.slane %v385, 2
        %v387 = vadd.f32 %v385, %v386
        %v388 = vrot.slane %v387, 1
        %v389 = vadd.f32 %v387, %v388
        %v390 = vsel %vm260, %v362, 0.0
        %v391 = vrot.slane %v390, 4
        %v392 = vadd.f32 %v390, %v391
        %v393 = vrot.slane %v392, 2
        %v394 = vadd.f32 %v392, %v393
        %v395 = vrot.slane %v394, 1
        %v396 = vadd.f32 %v394, %v395
        %v397 = vsel %vm260, %v363, 0.0
        %v398 = vrot.slane %v397, 4
        %v399 = vadd.f32 %v397, %v398
        %v400 = vrot.slane %v399, 2
        %v401 = vadd.f32 %v399, %v400
        %v402 = vrot.slane %v401, 1
        %v403 = vadd.f32 %v401, %v402
        %v404 = vsel %vm260, %v364, 0.0
        %v405 = vrot.slane %v404, 4
        %v406 = vadd.f32 %v404, %v405
        %v407 = vrot.slane %v406, 2
        %v408 = vadd.f32 %v406, %v407
        %v409 = vrot.slane %v408, 1
        %v410 = vadd.f32 %v408, %v409
        %v411 = vsel %vm260, %v365, 0.0
        %v412 = vrot.slane %v411, 4
        %v413 = vadd.f32 %v411, %v412
        %v414 = vrot.slane %v413, 2
        %v415 = vadd.f32 %v413, %v414
        %v416 = vrot.slane %v415, 1
        %v417 = vadd.f32 %v415, %v416
        %v418 = vsel %vm260, %v366, 0.0
        %v419 = vrot.slane %v418, 4
        %v420 = vadd.f32 %v418, %v419
        %v421 = vrot.slane %v420, 2
        %v422 = vadd.f32 %v420, %v421
        %v423 = vrot.slane %v422, 1
        %v424 = vadd.f32 %v422, %v423
        %v425 = vsel %vm260, %v367, 0.0
        %v426 = vrot.slane %v425, 4
        %v427 = vadd.f32 %v425, %v426
        %v428 = vrot.slane %v427, 2
        %v429 = vadd.f32 %v427, %v428
        %v430 = vrot.slane %v429, 1
        %v431 = vadd.f32 %v429, %v430
        %v432 = vlog2.pop %v382
        %v433 = vmul.f32 %v432, 0.6931472
        %v434 = vlog2.pop %v389
        %v435 = vmul.f32 %v434, 0.6931472
        %v436 = vlog2.pop %v396
        %v437 = vmul.f32 %v436, 0.6931472
        %v438 = vlog2.pop %v403
        %v439 = vmul.f32 %v438, 0.6931472
        %v440 = vlog2.pop %v410
        %v441 = vmul.f32 %v440, 0.6931472
        %v442 = vlog2.pop %v417
        %v443 = vmul.f32 %v442, 0.6931472
        %v444 = vlog2.pop %v424
        %v445 = vmul.f32 %v444, 0.6931472
        %v446 = vlog2.pop %v431
        %v447 = vmul.f32 %v446, 0.6931472
        %v448 = vlaneseq
        %v449 = vshrl.u32 %v448, 7
        %v450 = vperm.slane %v232, 0
        %v451 = vperm.slane %v232, 1
        %v452 = vperm.slane %v232, 2
        %v453 = vperm.slane %v232, 3
        %v454 = vperm.slane %v232, 4
        %v455 = vperm.slane %v232, 5
        %v456 = vperm.slane %v232, 6
        %v457 = vperm.slane %v232, 7
        %vm458 = vcmp.eq.s32.totalorder %v449, %v450
        %vm459 = vcmp.eq.s32.totalorder %v449, %v451
        %vm460 = vcmp.eq.s32.totalorder %v449, %v452
        %vm461 = vcmp.eq.s32.totalorder %v449, %v453
        %vm462 = vcmp.eq.s32.totalorder %v449, %v454
        %vm463 = vcmp.eq.s32.totalorder %v449, %v455
        %vm464 = vcmp.eq.s32.totalorder %v449, %v456
        %vm465 = vcmp.eq.s32.totalorder %v449, %v457
        %466 = vst [vmem:[#allocation1] ss:$2 sm:$0xff] %v226
        %s467 = scalar_lea.vmem [#allocation1], 16
        %468 = vst [vmem:[%s467] ss:$2 sm:$0xff] %v227
        %s469 = scalar_lea.vmem [#allocation1], 32
        %470 = vst [vmem:[%s469] ss:$2 sm:$0xff] %v228
        %s471 = scalar_lea.vmem [#allocation1], 48
        %472 = vst [vmem:[%s471] ss:$2 sm:$0xff] %v229
        %v473 = vld.sshfl [vmem:[#allocation1] sm:$0xff pattern:$0x75316420]
        %v474 = vld.sshfl [vmem:[#allocation1 + $0x8] sm:$0xff pattern:$0x75316420]
        %v475 = vld.sshfl [vmem:[#allocation1 + $0x10] sm:$0xff pattern:$0x75316420]
        %v476 = vld.sshfl [vmem:[#allocation1 + $0x18] sm:$0xff pattern:$0x75316420]
        %v477 = vld.sshfl [vmem:[#allocation1 + $0x20] sm:$0xff pattern:$0x75316420]
        %v478 = vld.sshfl [vmem:[#allocation1 + $0x28] sm:$0xff pattern:$0x75316420]
        %v479 = vld.sshfl [vmem:[#allocation1 + $0x30] sm:$0xff pattern:$0x75316420]
        %v480 = vld.sshfl [vmem:[#allocation1 + $0x38] sm:$0xff pattern:$0x75316420]
        %v489 = vsel %vm458, %v473, 0.0
        %v490 = vsel %vm459, %v474, 0.0
        %v491 = vsel %vm460, %v475, 0.0
        %v492 = vsel %vm461, %v476, 0.0
        %v493 = vsel %vm462, %v477, 0.0
        %v494 = vsel %vm463, %v478, 0.0
        %v495 = vsel %vm464, %v479, 0.0
        %v496 = vsel %vm465, %v480, 0.0
        %v497 = vsel %vm260, %v489, 0.0
        %v498 = vrot.slane %v497, 4
        %v499 = vadd.f32 %v497, %v498
        %v500 = vrot.slane %v499, 2
        %v501 = vadd.f32 %v499, %v500
        %v502 = vrot.slane %v501, 1
        %v503 = vadd.f32 %v501, %v502
        %v504 = vsel %vm260, %v490, 0.0
        %v505 = vrot.slane %v504, 4
        %v506 = vadd.f32 %v504, %v505
        %v507 = vrot.slane %v506, 2
        %v508 = vadd.f32 %v506, %v507
        %v509 = vrot.slane %v508, 1
        %v510 = vadd.f32 %v508, %v509
        %v511 = vsel %vm260, %v491, 0.0
        %v512 = vrot.slane %v511, 4
        %v513 = vadd.f32 %v511, %v512
        %v514 = vrot.slane %v513, 2
        %v515 = vadd.f32 %v513, %v514
        %v516 = vrot.slane %v515, 1
        %v517 = vadd.f32 %v515, %v516
        %v518 = vsel %vm260, %v492, 0.0
        %v519 = vrot.slane %v518, 4
        %v520 = vadd.f32 %v518, %v519
        %v521 = vrot.slane %v520, 2
        %v522 = vadd.f32 %v520, %v521
        %v523 = vrot.slane %v522, 1
        %v524 = vadd.f32 %v522, %v523
        %v525 = vsel %vm260, %v493, 0.0
        %v526 = vrot.slane %v525, 4
        %v527 = vadd.f32 %v525, %v526
        %v528 = vrot.slane %v527, 2
        %v529 = vadd.f32 %v527, %v528
        %v530 = vrot.slane %v529, 1
        %v531 = vadd.f32 %v529, %v530
        %v532 = vsel %vm260, %v494, 0.0
        %v533 = vrot.slane %v532, 4
        %v534 = vadd.f32 %v532, %v533
        %v535 = vrot.slane %v534, 2
        %v536 = vadd.f32 %v534, %v535
        %v537 = vrot.slane %v536, 1
        %v538 = vadd.f32 %v536, %v537
        %v539 = vsel %vm260, %v495, 0.0
        %v540 = vrot.slane %v539, 4
        %v541 = vadd.f32 %v539, %v540
        %v542 = vrot.slane %v541, 2
        %v543 = vadd.f32 %v541, %v542
        %v544 = vrot.slane %v543, 1
        %v545 = vadd.f32 %v543, %v544
        %v546 = vsel %vm260, %v496, 0.0
        %v547 = vrot.slane %v546, 4
        %v548 = vadd.f32 %v546, %v547
        %v549 = vrot.slane %v548, 2
        %v550 = vadd.f32 %v548, %v549
        %v551 = vrot.slane %v550, 1
        %v552 = vadd.f32 %v550, %v551
        %v553 = vadd.f32 %v267, %v433
        %v554 = vadd.f32 %v274, %v435
        %v555 = vadd.f32 %v281, %v437
        %v556 = vadd.f32 %v288, %v439
        %v557 = vadd.f32 %v295, %v441
        %v558 = vadd.f32 %v302, %v443
        %v559 = vadd.f32 %v309, %v445
        %v560 = vadd.f32 %v316, %v447
        %v561 = vsub.f32 %v553, %v503
        %v562 = vsub.f32 %v554, %v510
        %v563 = vsub.f32 %v555, %v517
        %v564 = vsub.f32 %v556, %v524
        %v565 = vsub.f32 %v557, %v531
        %v566 = vsub.f32 %v558, %v538
        %v567 = vsub.f32 %v559, %v545
        %v568 = vsub.f32 %v560, %v552
        %v577 = vrot.slane %v562, 7
        %v578 = vrot.slane %v563, 6
        %v579 = vrot.slane %v564, 5
        %v580 = vrot.slane %v565, 4
        %v581 = vrot.slane %v566, 3
        %v582 = vrot.slane %v567, 2
        %v583 = vrot.slane %v568, 1
        %vm584 = vcmask 1040384
        %v585 = vsel %vm584, %v561, %v577
        %vm586 = vcmask 1042434
        %v587 = vsel %vm586, %v578, %v579
        %vm588 = vcmask 1041408
        %v589 = vsel %vm588, %v585, %v587
        %vm590 = vcmask 1044484
        %v591 = vsel %vm590, %v580, %v581
        %vm592 = vcmask 1046534
        %v593 = vsel %vm592, %v582, %v583
        %vm594 = vcmask 1045508
        %v595 = vsel %vm594, %v591, %v593
        %v596 = vsel %vm260, %v589, %v595
        %v598 = vsel %vm231, %v596, -1.0
        %599 = vst [vmem:[%s222] sm:$0xff] %v598
        %s600 = sand.u32 %s100, 1
        %s601 = scalar_lea.sflag [#allocation4], %s600
        %s602 = sand.u32 %s100, 1
        %s603 = smul.addr %s602, 8
        %s604 = scalar_lea.vmem [#allocation7], %s603
        // Predicated region
        $region37: #{tpu_custom_call.1} parent=27 // pred_check
          %p605 = pneg %p110
        $region38: #{tpu_custom_call.1} parent=27 // pred_check_branch
          %607 = sbr.rel (%p605) target = $region40
        $region39: #{tpu_custom_call.1} parent=27 // pred_region
          %s608 = smul.u32 8, %s27
          %610 = vsyncadd %s601, 0
          %s611 = smul.addr %s26, 8
          %s612 = sadd.s32 %s608, %s611
          %s613 = scalar_lea.hbm %s2, %s612
          %s615 = sshll.u32 %s604, 4
          %s616 = int_to_ptr.vmem [resolvable:$true] %s615
          %s617 = sshll.u32 %s613, 4
          %s618 = int_to_ptr.hbm [resolvable:$true] %s617
          %620 = dma.vmem_to_hbm [thread:$0]  %s616, 128, %s618, %s601
        $region40: #{tpu_custom_call.1} parent=27 // pred_fallthru
          _
      $region28: #{tpu_custom_call.1} parent=5 // pred_fallthru
        _
      %p621 = scmp.le.s32.totalorder 2, %s17
      // Predicated region
      $region41: #{tpu_custom_call.1} parent=5 // pred_check
        %p622 = pneg %p621
      $region42: #{tpu_custom_call.1} parent=5 // pred_check_branch
        %624 = sbr.rel (%p622) target = $region44
      $region43: #{tpu_custom_call.1} parent=5 // pred_region
        %s625 = ssub.s32 %s17, 2
        // Predicated region
        $region45: #{tpu_custom_call.1} parent=43 // pred_check
          %p626 = pneg %p116
        $region46: #{tpu_custom_call.1} parent=43 // pred_check_branch
          %628 = sbr.rel (%p626) target = $region48
        $region47: #{tpu_custom_call.1} parent=43 // pred_region
          %s629 = sand.u32 %s101, 1
          %s630 = scalar_lea.sflag [#allocation4], %s629
          %s631 = sand.u32 %s101, 1
          %s632 = smul.addr %s631, 8
          %s633 = scalar_lea.vmem [#allocation7], %s632
          %635 = dma.done %s630, 128
        $region48: #{tpu_custom_call.1} parent=43 // pred_fallthru
          _
      $region44: #{tpu_custom_call.1} parent=5 // pred_fallthru
        _
    $region6: #{tpu_custom_call.1} parent=1 // loop_footer
      %s21 = sadd.s32 1, %s17
    $region7: #{tpu_custom_call.1} parent=1 // loop_footer_branch
      %16 = sbr.rel target = $region3
    $region8: #{tpu_custom_call.1} parent=1 // loop_exit
      _
    %636 = vsyncpa [#allocation3], 1
    %s637 = scalar_lea.sflag [#allocation3], 1
    %638 = vsyncpa %s637, 1
    %639 = vsyncpa [#allocation6], 1
    %s640 = scalar_lea.sflag [#allocation6], 1
    %641 = vsyncpa %s640, 1
    %642 = vsyncpa [#allocation4], 1
    %s643 = scalar_lea.sflag [#allocation4], 1
    %644 = vsyncpa %s643, 1

</llo_original>
